<compile_context>
chip_gen: v7x
topology: tpu7x:2x2x1
jax: 0.10.0
libtpu: 0.0.40
codegen_flags: <defaults>
</compile_context>

<pallas_src>
import jax
import jax.numpy as jnp
from jax.experimental import pallas as pl
from jax.experimental.pallas import tpu as pltpu


def _self_attn_classifier_kernel(out_ref, w1_ref, b1_ref, w2_ref, b2_ref,
                                 w3_ref, b3_ref, logp_ref, attn_ref):
    """Processes TB batch rows per grid step.

    out_ref : (TB, T, D)   input sequence block (D = 2*lstm_dim)
    w1_ref  : (D, da)      attention Linear 1 (input-major)
    b1_ref  : (1, da)
    w2_ref  : (da, r)      attention Linear 2 (compact, r = 3)
    b2_ref  : (1, r)
    w3_ref  : (3*D, K)     classifier head, W3^T (compact)
    b3_ref  : (1, K)
    logp_ref: (TB, K)      compact log-softmax output block
    attn_ref: (TB, T, r)   compact attention-weight output block
    """
    TB, T, D = out_ref.shape
    r = w2_ref.shape[1]

    x = out_ref[...]                                        # (TB, T, D)
    xf = x.reshape(TB * T, D)                               # MXU-sized M dimension

    # --- attention MLP: Linear(D, da) -> tanh -> Linear(da, r) ---
    h = jnp.tanh(jnp.dot(xf, w1_ref[...],
                         preferred_element_type=jnp.float32) + b1_ref[...])   # (TB*T, da)
    s = jnp.dot(h, w2_ref[...],
                preferred_element_type=jnp.float32) + b2_ref[...]             # (TB*T, r)
    s = s.reshape(TB, T, r)

    # --- softmax over the sequence axis (torch: F.softmax(..., dim=1)) ---
    mx = jnp.max(s, axis=1, keepdims=True)                  # (TB, 1, r)
    e = jnp.exp(s - mx)
    inv = 1.0 / jnp.sum(e, axis=1, keepdims=True)           # one divide per column, not T
    a = e * inv                                             # (TB, T, r)
    attn_ref[...] = a                                       # compact (TB, T, r) store

    # --- weighted sums on the VPU/XLU: m_i = sum_t a[:,t,i] * x[:,t,:] -> (TB, D) ---
    m0 = jnp.sum(x * a[:, :, 0:1], axis=1)
    m1 = jnp.sum(x * a[:, :, 1:2], axis=1)
    m2 = jnp.sum(x * a[:, :, 2:3], axis=1)
    feats = jnp.concatenate([m0, m1, m2], axis=-1)          # (TB, 3*D) = [m1|m2|m3]

    # --- classifier head: one MXU push with contraction length 3*D ---
    logits = jnp.dot(feats, w3_ref[...],
                     preferred_element_type=jnp.float32) + b3_ref[...]        # (TB, K)

    # --- log_softmax over the tag axis ---
    lmax = jnp.max(logits, axis=-1, keepdims=True)
    sh = logits - lmax
    lse = jnp.log(jnp.sum(jnp.exp(sh), axis=-1, keepdims=True))
    logp_ref[...] = sh - lse                                # (TB, K)


def prepare_params(params):
    """One-time weight preparation (dtype/transpose/reshape) — hoisted out of the call path."""
    W1, b1, W2, b2, W3, b3 = params
    D, da = W1.shape
    r = W2.shape[1]
    K = W3.shape[0]
    assert r == 3, "classifier hard-codes r == 3 (m1, m2, m3)"
    assert W3.shape[1] == r * D

    w1 = W1.astype(jnp.float32)
    b1p = b1.reshape(1, da).astype(jnp.float32)
    w2p = W2.astype(jnp.float32)
    b2p = b2.reshape(1, r).astype(jnp.float32)
    w3p = jnp.transpose(W3).astype(jnp.float32)             # torch (K, 3D) -> (3D, K)
    b3p = b3.reshape(1, K).astype(jnp.float32)
    return (w1, b1p, w2p, b2p, w3p, b3p), (r, K)


def _pick_tb(B, tb_max=128, min_blocks=2):
    """Pick the batch block.

    Goals: blocks big enough to amortize per-step pipeline overhead / fill the MXU,
    >= min_blocks grid steps so v7x megacore can shard the batch axis, tb a multiple
    of 8 (sublane) when blocked, and tb dividing B so no wrapper-side input pad.
    """
    if B <= 8:
        return B, B                                 # single block == full array (legal)
    cap = max(8, (B // min_blocks) // 8 * 8)        # keep >= min_blocks blocks
    tb = min(tb_max, cap)
    for cand in range(tb, 7, -8):                   # largest multiple-of-8 divisor of B
        if B % cand == 0:
            return cand, B
    B_pad = pl.cdiv(B, tb) * tb                     # fallback: small pad of the batch
    return tb, B_pad


def self_attention_classifier(out, prepped, *, tb=128):
    """out: (B, T, 2*lstm_dim) f32. Returns (log_probs (B, K), attn (B, T, r))."""
    (w1, b1p, w2p, b2p, w3p, b3p), (r, K) = prepped
    B, T, D = out.shape
    da = w1.shape[1]

    tb_eff, B_pad = _pick_tb(B, tb_max=tb)
    x = out
    if B_pad != B:
        # Fallback only; _pick_tb avoids this whenever B has a multiple-of-8 divisor.
        x = jnp.pad(out, ((0, B_pad - B), (0, 0), (0, 0)))

    # VMEM budget: double-buffered activation blocks + (double-buffered) weights + slack.
    per_step_bytes = 4 * (tb_eff * T * D + tb_eff * T * r + tb_eff * K)
    weight_bytes = 4 * (D * da + da + da * r + r + 3 * D * K + K)
    vmem_limit = int(min(max(2 * per_step_bytes + 2 * weight_bytes + (8 << 20), 32 << 20),
                         48 << 20))                 # stay well under v7x's 64 MiB physical

    logp, attn = pl.pallas_call(
        _self_attn_classifier_kernel,
        out_shape=(jax.ShapeDtypeStruct((B_pad, K), jnp.float32),
                   jax.ShapeDtypeStruct((B_pad, T, r), jnp.float32)),
        grid=(B_pad // tb_eff,),
        in_specs=[
            pl.BlockSpec((tb_eff, T, D), lambda i: (i, 0, 0)),   # batch block of the input
            pl.BlockSpec((D, da),        lambda i: (0, 0)),      # W1 (whole)
            pl.BlockSpec((1, da),        lambda i: (0, 0)),      # b1
            pl.BlockSpec((da, r),        lambda i: (0, 0)),      # W2 (compact)
            pl.BlockSpec((1, r),         lambda i: (0, 0)),      # b2
            pl.BlockSpec((3 * D, K),     lambda i: (0, 0)),      # W3^T (compact)
            pl.BlockSpec((1, K),         lambda i: (0, 0)),      # b3
        ],
        out_specs=(
            pl.BlockSpec((tb_eff, K),    lambda i: (i, 0)),      # compact log-prob block
            pl.BlockSpec((tb_eff, T, r), lambda i: (i, 0, 0)),   # compact attention block
        ),
        compiler_params=pltpu.CompilerParams(
            dimension_semantics=("parallel",),                   # batch rows are independent
            vmem_limit_bytes=vmem_limit),
    )(x, w1, b1p, w2p, b2p, w3p, b3p)

    if B_pad != B:
        logp = logp[:B]
        attn = attn[:B]
    return logp, attn


def reference(out, W1, b1, W2, b2, W3, b3):
    """Pure-JAX reference mirroring the PyTorch forward."""
    h = jnp.tanh(out @ W1 + b1)
    s = h @ W2 + b2
    a = jax.nn.softmax(s, axis=1)
    m = jnp.einsum('btr,btd->brd', a, out)
    feats = m.reshape(out.shape[0], -1)              # [m1 | m2 | m3]
    logits = feats @ W3.T + b3
    return jax.nn.log_softmax(logits, axis=-1), a


if __name__ == "__main__":
    lstm_dim, da, r, tagset = 16, 16, 3, 4
    B, T = 2, 8
    D = 2 * lstm_dim                                 # 32

    key = jax.random.PRNGKey(0)
    ks = jax.random.split(key, 7)
    out = jax.random.normal(ks[0], (B, T, D), jnp.float32)
    # Deterministic synthetic parameters (shapes per nn.Linear defs in __init__).
    W1 = 0.1 * jax.random.normal(ks[1], (D, da), jnp.float32)                 # Linear(2*lstm_dim, da), input-major
    b1 = 0.1 * jax.random.normal(ks[2], (da,), jnp.float32)
    W2 = 0.1 * jax.random.normal(ks[3], (da, r), jnp.float32)                 # Linear(da, r), input-major
    b2 = 0.1 * jax.random.normal(ks[4], (r,), jnp.float32)
    W3 = 0.1 * jax.random.normal(ks[5], (tagset, 6 * lstm_dim), jnp.float32)  # Linear(6*lstm_dim, tagset), torch (out,in)
    b3 = 0.1 * jax.random.normal(ks[6], (tagset,), jnp.float32)

    prepped = prepare_params((W1, b1, W2, b2, W3, b3))
    logp, attn = self_attention_classifier(out, prepped)
    jax.block_until_ready((logp, attn))

    ref_logp, ref_attn = reference(out, W1, b1, W2, b2, W3, b3)
    assert logp.shape == (B, tagset) and attn.shape == (B, T, r)
    assert jnp.allclose(logp, ref_logp, atol=1e-5, rtol=1e-5)
    assert jnp.allclose(attn, ref_attn, atol=1e-5, rtol=1e-5)
    print("KERNEL_OK")
</pallas_src>

<mosaic_0001>
module attributes {stable_mosaic.version = 11 : i64} {
  func.func @_self_attn_classifier_kernel(%arg0: i32, %arg1: memref<2x8x32xf32, #tpu.memory_space<vmem>>, %arg2: memref<32x16xf32, #tpu.memory_space<vmem>>, %arg3: memref<1x16xf32, #tpu.memory_space<vmem>>, %arg4: memref<16x3xf32, #tpu.memory_space<vmem>>, %arg5: memref<1x3xf32, #tpu.memory_space<vmem>>, %arg6: memref<96x4xf32, #tpu.memory_space<vmem>>, %arg7: memref<1x4xf32, #tpu.memory_space<vmem>>, %arg8: memref<2x4xf32, #tpu.memory_space<vmem>>, %arg9: memref<2x8x3xf32, #tpu.memory_space<vmem>>) attributes {dimension_semantics = [#tpu.dimension_semantics<parallel>], iteration_bounds = array<i64: 1>, scalar_prefetch = 0 : i64, scratch_operands = 0 : i64, tpu.core_type = #tpu.core_type<tc>, window_params = [{transform_indices = @transform_0, window_bounds = array<i64: 2, 8, 32>}, {pipeline_mode = #tpu.pipeline_mode<synchronous>, transform_indices = @transform_1, window_bounds = array<i64: 32, 16>}, {pipeline_mode = #tpu.pipeline_mode<synchronous>, transform_indices = @transform_2, window_bounds = array<i64: 1, 16>}, {pipeline_mode = #tpu.pipeline_mode<synchronous>, transform_indices = @transform_3, window_bounds = array<i64: 16, 3>}, {pipeline_mode = #tpu.pipeline_mode<synchronous>, transform_indices = @transform_4, window_bounds = array<i64: 1, 3>}, {pipeline_mode = #tpu.pipeline_mode<synchronous>, transform_indices = @transform_5, window_bounds = array<i64: 96, 4>}, {pipeline_mode = #tpu.pipeline_mode<synchronous>, transform_indices = @transform_6, window_bounds = array<i64: 1, 4>}, {transform_indices = @transform_7, window_bounds = array<i64: 2, 4>}, {transform_indices = @transform_8, window_bounds = array<i64: 2, 8, 3>}]} {
    %c0 = arith.constant 0 : index
    %c0_0 = arith.constant 0 : index
    %c0_1 = arith.constant 0 : index
    %0 = vector.load %arg1[%c0, %c0_0, %c0_1] : memref<2x8x32xf32, #tpu.memory_space<vmem>>, vector<2x8x32xf32>
    %1 = vector.shape_cast %0 : vector<2x8x32xf32> to vector<16x32xf32>
    %c0_2 = arith.constant 0 : index
    %c0_3 = arith.constant 0 : index
    %2 = vector.load %arg2[%c0_2, %c0_3] : memref<32x16xf32, #tpu.memory_space<vmem>>, vector<32x16xf32>
    %cst = arith.constant dense<0.000000e+00> : vector<16x16xf32>
    %3 = tpu.matmul %1, %2, %cst {dimension_numbers = #tpu.dot_dimension_numbers<[1], [0], [0], [1], [0, 0, 1, 1], [], []>} : vector<16x32xf32>, vector<32x16xf32>, vector<16x16xf32> -> vector<16x16xf32>
    %c0_4 = arith.constant 0 : index
    %c0_5 = arith.constant 0 : index
    %4 = vector.load %arg3[%c0_4, %c0_5] : memref<1x16xf32, #tpu.memory_space<vmem>>, vector<1x16xf32>
    %5 = vector.broadcast %4 : vector<1x16xf32> to vector<16x16xf32>
    %6 = arith.addf %3, %5 : vector<16x16xf32>
    %7 = math.tanh %6 : vector<16x16xf32>
    %c0_6 = arith.constant 0 : index
    %c0_7 = arith.constant 0 : index
    %8 = vector.load %arg4[%c0_6, %c0_7] : memref<16x3xf32, #tpu.memory_space<vmem>>, vector<16x3xf32>
    %cst_8 = arith.constant dense<0.000000e+00> : vector<16x3xf32>
    %9 = tpu.matmul %7, %8, %cst_8 {dimension_numbers = #tpu.dot_dimension_numbers<[1], [0], [0], [1], [0, 0, 1, 1], [], []>} : vector<16x16xf32>, vector<16x3xf32>, vector<16x3xf32> -> vector<16x3xf32>
    %c0_9 = arith.constant 0 : index
    %c0_10 = arith.constant 0 : index
    %10 = vector.load %arg5[%c0_9, %c0_10] : memref<1x3xf32, #tpu.memory_space<vmem>>, vector<1x3xf32>
    %11 = vector.broadcast %10 : vector<1x3xf32> to vector<16x3xf32>
    %12 = arith.addf %9, %11 : vector<16x3xf32>
    %13 = vector.shape_cast %12 : vector<16x3xf32> to vector<2x8x3xf32>
    %cst_11 = arith.constant dense<0xFF800000> : vector<2x3xf32>
    %14 = vector.multi_reduction <maximumf>, %13, %cst_11 [1] : vector<2x8x3xf32> to vector<2x3xf32>
    %15 = vector.shape_cast %14 : vector<2x3xf32> to vector<2x1x3xf32>
    %16 = vector.broadcast %15 : vector<2x1x3xf32> to vector<2x8x3xf32>
    %17 = arith.subf %13, %16 : vector<2x8x3xf32>
    %18 = math.exp %17 : vector<2x8x3xf32>
    %cst_12 = arith.constant dense<0.000000e+00> : vector<2x3xf32>
    %19 = vector.multi_reduction <add>, %18, %cst_12 [1] : vector<2x8x3xf32> to vector<2x3xf32>
    %20 = vector.shape_cast %19 : vector<2x3xf32> to vector<2x1x3xf32>
    %cst_13 = arith.constant 1.000000e+00 : f32
    %21 = vector.broadcast %cst_13 : f32 to vector<2x1x3xf32>
    %22 = arith.divf %21, %20 : vector<2x1x3xf32>
    %23 = vector.broadcast %22 : vector<2x1x3xf32> to vector<2x8x3xf32>
    %24 = arith.mulf %18, %23 : vector<2x8x3xf32>
    %c0_14 = arith.constant 0 : index
    %c0_15 = arith.constant 0 : index
    %c0_16 = arith.constant 0 : index
    %25 = vector.load %arg9[%c0_14, %c0_15, %c0_16] : memref<2x8x3xf32, #tpu.memory_space<vmem>>, vector<2x8x3xf32>
    tpu.vector_store %arg9[%c0_14, %c0_15, %c0_16], %24 {strides = array<i32>} : memref<2x8x3xf32, #tpu.memory_space<vmem>>, vector<2x8x3xf32>,
    %26 = vector.extract_strided_slice %24 {offsets = [0, 0, 0], sizes = [2, 8, 1], strides = [1, 1, 1]} : vector<2x8x3xf32> to vector<2x8x1xf32>
    %27 = vector.broadcast %26 : vector<2x8x1xf32> to vector<2x8x32xf32>
    %28 = arith.mulf %0, %27 : vector<2x8x32xf32>
    %cst_17 = arith.constant dense<0.000000e+00> : vector<2x32xf32>
    %29 = vector.multi_reduction <add>, %28, %cst_17 [1] : vector<2x8x32xf32> to vector<2x32xf32>
    %30 = vector.extract_strided_slice %24 {offsets = [0, 0, 1], sizes = [2, 8, 1], strides = [1, 1, 1]} : vector<2x8x3xf32> to vector<2x8x1xf32>
    %31 = vector.broadcast %30 : vector<2x8x1xf32> to vector<2x8x32xf32>
    %32 = arith.mulf %0, %31 : vector<2x8x32xf32>
    %cst_18 = arith.constant dense<0.000000e+00> : vector<2x32xf32>
    %33 = vector.multi_reduction <add>, %32, %cst_18 [1] : vector<2x8x32xf32> to vector<2x32xf32>
    %34 = vector.extract_strided_slice %24 {offsets = [0, 0, 2], sizes = [2, 8, 1], strides = [1, 1, 1]} : vector<2x8x3xf32> to vector<2x8x1xf32>
    %35 = vector.broadcast %34 : vector<2x8x1xf32> to vector<2x8x32xf32>
    %36 = arith.mulf %0, %35 : vector<2x8x32xf32>
    %cst_19 = arith.constant dense<0.000000e+00> : vector<2x32xf32>
    %37 = vector.multi_reduction <add>, %36, %cst_19 [1] : vector<2x8x32xf32> to vector<2x32xf32>
    %38 = tpu.concatenate %29, %33, %37 in 1 : vector<2x32xf32>, vector<2x32xf32>, vector<2x32xf32> -> vector<2x96xf32>
    %c0_20 = arith.constant 0 : index
    %c0_21 = arith.constant 0 : index
    %39 = vector.load %arg6[%c0_20, %c0_21] : memref<96x4xf32, #tpu.memory_space<vmem>>, vector<96x4xf32>
    %cst_22 = arith.constant dense<0.000000e+00> : vector<2x4xf32>
    %40 = tpu.matmul %38, %39, %cst_22 {dimension_numbers = #tpu.dot_dimension_numbers<[1], [0], [0], [1], [0, 0, 1, 1], [], []>} : vector<2x96xf32>, vector<96x4xf32>, vector<2x4xf32> -> vector<2x4xf32>
    %c0_23 = arith.constant 0 : index
    %c0_24 = arith.constant 0 : index
    %41 = vector.load %arg7[%c0_23, %c0_24] : memref<1x4xf32, #tpu.memory_space<vmem>>, vector<1x4xf32>
    %42 = vector.broadcast %41 : vector<1x4xf32> to vector<2x4xf32>
    %43 = arith.addf %40, %42 : vector<2x4xf32>
    %cst_25 = arith.constant dense<0xFF800000> : vector<2xf32>
    %44 = vector.multi_reduction <maximumf>, %43, %cst_25 [1] : vector<2x4xf32> to vector<2xf32>
    %45 = vector.shape_cast %44 : vector<2xf32> to vector<2x1xf32>
    %46 = vector.broadcast %45 : vector<2x1xf32> to vector<2x4xf32>
    %47 = arith.subf %43, %46 : vector<2x4xf32>
    %48 = math.exp %47 : vector<2x4xf32>
    %cst_26 = arith.constant dense<0.000000e+00> : vector<2xf32>
    %49 = vector.multi_reduction <add>, %48, %cst_26 [1] : vector<2x4xf32> to vector<2xf32>
    %50 = vector.shape_cast %49 : vector<2xf32> to vector<2x1xf32>
    %51 = math.log %50 : vector<2x1xf32>
    %52 = vector.broadcast %51 : vector<2x1xf32> to vector<2x4xf32>
    %53 = arith.subf %47, %52 : vector<2x4xf32>
    %c0_27 = arith.constant 0 : index
    %c0_28 = arith.constant 0 : index
    %54 = vector.load %arg8[%c0_27, %c0_28] : memref<2x4xf32, #tpu.memory_space<vmem>>, vector<2x4xf32>
    tpu.vector_store %arg8[%c0_27, %c0_28], %53 {strides = array<i32>} : memref<2x4xf32, #tpu.memory_space<vmem>>, vector<2x4xf32>,
    return
  }
  func.func @transform_0(%arg0: i32) -> (i32, i32, i32) {
    %c0_i32 = arith.constant 0 : i32
    %c0_i32_0 = arith.constant 0 : i32
    %c0_i32_1 = arith.constant 0 : i32
    return %arg0, %c0_i32, %c0_i32_0 : i32, i32, i32
  }
  func.func @transform_1(%arg0: i32) -> (i32, i32) {
    %c0_i32 = arith.constant 0 : i32
    %c0_i32_0 = arith.constant 0 : i32
    %c0_i32_1 = arith.constant 0 : i32
    return %c0_i32, %c0_i32_0 : i32, i32
  }
  func.func @transform_2(%arg0: i32) -> (i32, i32) {
    %c0_i32 = arith.constant 0 : i32
    %c0_i32_0 = arith.constant 0 : i32
    %c0_i32_1 = arith.constant 0 : i32
    return %c0_i32, %c0_i32_0 : i32, i32
  }
  func.func @transform_3(%arg0: i32) -> (i32, i32) {
    %c0_i32 = arith.constant 0 : i32
    %c0_i32_0 = arith.constant 0 : i32
    %c0_i32_1 = arith.constant 0 : i32
    return %c0_i32, %c0_i32_0 : i32, i32
  }
  func.func @transform_4(%arg0: i32) -> (i32, i32) {
    %c0_i32 = arith.constant 0 : i32
    %c0_i32_0 = arith.constant 0 : i32
    %c0_i32_1 = arith.constant 0 : i32
    return %c0_i32, %c0_i32_0 : i32, i32
  }
  func.func @transform_5(%arg0: i32) -> (i32, i32) {
    %c0_i32 = arith.constant 0 : i32
    %c0_i32_0 = arith.constant 0 : i32
    %c0_i32_1 = arith.constant 0 : i32
    return %c0_i32, %c0_i32_0 : i32, i32
  }
  func.func @transform_6(%arg0: i32) -> (i32, i32) {
    %c0_i32 = arith.constant 0 : i32
    %c0_i32_0 = arith.constant 0 : i32
    %c0_i32_1 = arith.constant 0 : i32
    return %c0_i32, %c0_i32_0 : i32, i32
  }
  func.func @transform_7(%arg0: i32) -> (i32, i32) {
    %c0_i32 = arith.constant 0 : i32
    %c0_i32_0 = arith.constant 0 : i32
    return %arg0, %c0_i32 : i32, i32
  }
  func.func @transform_8(%arg0: i32) -> (i32, i32, i32) {
    %c0_i32 = arith.constant 0 : i32
    %c0_i32_0 = arith.constant 0 : i32
    %c0_i32_1 = arith.constant 0 : i32
    return %arg0, %c0_i32, %c0_i32_0 : i32, i32, i32
  }
}

</mosaic_0001>

<llo_original>
// kernel: tpu_custom_call.1
$region0: #{tpu_custom_call.1}
  #allocation0 [shape = 'u32[]', space=smem, size = 0x4, offset = 0x4, fixed_abs, tag = 'smem constant byte address 0x4 - core index']
  #allocation1 [shape = 'u32[144,128]{1,0:T(1,128)}', space=vmem, size = 0x12000, scoped, tag = 'internal scratch']
  %s0 = inlined_call_operand.vmem [shape: f32[2,8,32], index: 0, kind: input, shape index: {}]
  %s1 = inlined_call_operand.vmem [shape: f32[32,16], index: 1, kind: input, shape index: {}]
  %s2 = inlined_call_operand.vmem [shape: f32[1,16], index: 2, kind: input, shape index: {}]
  %s3 = inlined_call_operand.vmem [shape: f32[16,3], index: 3, kind: input, shape index: {}]
  %s4 = inlined_call_operand.vmem [shape: f32[1,3], index: 4, kind: input, shape index: {}]
  %s5 = inlined_call_operand.vmem [shape: f32[96,4], index: 5, kind: input, shape index: {}]
  %s6 = inlined_call_operand.vmem [shape: f32[1,4], index: 6, kind: input, shape index: {}]
  %s7 = inlined_call_operand.hbm [shape: f32[2,4], index: 7, kind: output, shape index: {0}]
  %s8 = inlined_call_operand.vmem [shape: f32[2,8,3], index: 8, kind: output, shape index: {1}]
  %9 = xla_tuple %s7, %s8
  %s10 = sld [smem:[#allocation0]]
  $region46: #{tpu_custom_call.1} parent=0
    _
  %s12 = ssub.s32 1, %s10
  %s13 = scalar_select 0, %s12, %s10
  $region1: #{tpu_custom_call.1} parent=0
    #allocation2 [shape = 'u8[1024]{0}', space=vmem, size = 0x400, scoped, tag = 'output window, operand 0, single buffered']
    #allocation3 [shape = 's32[1]{0}', space=sflag, size = 0x4, scoped, tag = 'scoped memory for tpu_custom_call.1']
    %14 = vsyncpa [#allocation3], 0
    // Predicated region
    $region2: #{tpu_custom_call.1} parent=1 // pred_check
      _
    $region3: #{tpu_custom_call.1} parent=1 // pred_check_branch
      %16 = sbr.rel (0) target = $region5
    $region4: #{tpu_custom_call.1} parent=1 // pred_region
      _
    $region5: #{tpu_custom_call.1} parent=1 // pred_fallthru
      _
    // Predicated region
    $region6: #{tpu_custom_call.1} parent=1 // pred_check
      _
    $region7: #{tpu_custom_call.1} parent=1 // pred_check_branch
      %18 = sbr.rel (0) target = $region9
    $region8: #{tpu_custom_call.1} parent=1 // pred_region
      _
    $region9: #{tpu_custom_call.1} parent=1 // pred_fallthru
      _
    // Predicated region
    $region10: #{tpu_custom_call.1} parent=1 // pred_check
      _
    $region11: #{tpu_custom_call.1} parent=1 // pred_check_branch
      %20 = sbr.rel (0) target = $region13
    $region12: #{tpu_custom_call.1} parent=1 // pred_region
      _
    $region13: #{tpu_custom_call.1} parent=1 // pred_fallthru
      _
    // Predicated region
    $region14: #{tpu_custom_call.1} parent=1 // pred_check
      _
    $region15: #{tpu_custom_call.1} parent=1 // pred_check_branch
      %22 = sbr.rel (0) target = $region17
    $region16: #{tpu_custom_call.1} parent=1 // pred_region
      _
    $region17: #{tpu_custom_call.1} parent=1 // pred_fallthru
      _
    // Predicated region
    $region18: #{tpu_custom_call.1} parent=1 // pred_check
      _
    $region19: #{tpu_custom_call.1} parent=1 // pred_check_branch
      %24 = sbr.rel (0) target = $region21
    $region20: #{tpu_custom_call.1} parent=1 // pred_region
      _
    $region21: #{tpu_custom_call.1} parent=1 // pred_fallthru
      _
    // Predicated region
    $region22: #{tpu_custom_call.1} parent=1 // pred_check
      _
    $region23: #{tpu_custom_call.1} parent=1 // pred_check_branch
      %26 = sbr.rel (0) target = $region25
    $region24: #{tpu_custom_call.1} parent=1 // pred_region
      _
    $region25: #{tpu_custom_call.1} parent=1 // pred_fallthru
      _
    // Predicated region
    $region26: #{tpu_custom_call.1} parent=1 // pred_check
      _
    $region27: #{tpu_custom_call.1} parent=1 // pred_check_branch
      %28 = sbr.rel (0) target = $region29
    $region28: #{tpu_custom_call.1} parent=1 // pred_region
      _
    $region29: #{tpu_custom_call.1} parent=1 // pred_fallthru
      _
    %v29 = vld [vmem:[%s0] sm:$0xff]
    %v30 = vld [vmem:[%s0 + $0x8] sm:$0xff]
    %v31 = vld [vmem:[%s1] sm:$0xff]
    %v32 = vld [vmem:[%s1 + $0x8] sm:$0xff]
    %v33 = vld [vmem:[%s1 + $0x10] sm:$0xff]
    %v34 = vld [vmem:[%s1 + $0x18] sm:$0xff]
    %v35 = vld [vmem:[%s2] sm:$0x1]
    %v37 = vlaneseq
    %v38 = vshrl.u32 %v37, 7
    %v39 = vsub.s32 0, %v38
    %v40 = vrot.slane %v35, %v39
    %vm42 = vcmask 261120
    %v44 = vsel %vm42, %v29, 0
    %v47 = vsel %vm42, %v30, 0
    %49 = vmatprep.subr.mxu0 0.0
    %50 = vmatpush1.msra.mxu0 %v31
    %51 = vmatprep.subr.mxu0 0.0
    %52 = vmatpush1.msra.mxu0 %v32
    %53 = vmatprep.subr.mxu0 0.0
    %54 = vmatpush1.msra.mxu0 %v33
    %55 = vmatprep.subr.mxu0 0.0
    %56 = vmatpush1.msra.mxu0 %v34
    %57 = vmatprep.subr.mxu0 0.0
    %58 = vmatpush1.msra.mxu0 0.0
    %59 = vmatprep.subr.mxu0 0.0
    %60 = vmatpush1.msra.mxu0 0.0
    %61 = vmatprep.subr.mxu0 0.0
    %62 = vmatpush1.msra.mxu0 0.0
    %63 = vmatprep.subr.mxu0 0.0
    %64 = vmatpush1.msra.mxu0 0.0
    %65 = vmatprep.subr.mxu0 0.0
    %66 = vmatpush1.msra.mxu0 0.0
    %67 = vmatprep.subr.mxu0 0.0
    %68 = vmatpush1.msra.mxu0 0.0
    %69 = vmatprep.subr.mxu0 0.0
    %70 = vmatpush1.msra.mxu0 0.0
    %71 = vmatprep.subr.mxu0 0.0
    %72 = vmatpush1.msra.mxu0 0.0
    %73 = vmatprep.subr.mxu0 0.0
    %74 = vmatpush1.msra.mxu0 0.0
    %75 = vmatprep.subr.mxu0 0.0
    %76 = vmatpush1.msra.mxu0 0.0
    %77 = vmatprep.subr.mxu0 0.0
    %78 = vmatpush1.msra.mxu0 0.0
    %79 = vmatprep.subr.mxu0 0.0
    %80 = vmatpush1.msra.mxu0 0.0
    %81 = vmatprep.subr.mxu0 0.0
    %82 = vmatpush1.msra.mxu0 0.0
    %83 = vmatprep.subr.mxu0 0.0
    %84 = vmatpush1.msra.mxu0 0.0
    %85 = vmatprep.subr.mxu0 0.0
    %86 = vmatpush1.msra.mxu0 0.0
    %87 = vmatprep.subr.mxu0 0.0
    %88 = vmatpush1.msra.mxu0 0.0
    %89 = vmatprep.subr.mxu0 0.0
    %90 = vmatpush1.msra.mxu0 0.0
    %91 = vmatprep.subr.mxu0 0.0
    %92 = vmatpush1.msra.mxu0 0.0
    %93 = vmatprep.subr.mxu0 0.0
    %94 = vmatpush1.msra.mxu0 0.0
    %95 = vmatprep.subr.mxu0 0.0
    %96 = vmatpush1.msra.mxu0 0.0
    %97 = vmatprep.subr.mxu0 0.0
    %98 = vmatpush1.msra.mxu0 0.0
    %99 = vmatprep.subr.mxu0 0.0
    %100 = vmatpush1.msra.mxu0 0.0
    %101 = vmatprep.subr.mxu0 0.0
    %102 = vmatpush1.msra.mxu0 0.0
    %103 = vmatprep.subr.mxu0 0.0
    %104 = vmatpush1.msra.mxu0 0.0
    %105 = vmatprep.subr.mxu0 0.0
    %106 = vmatpush1.msra.mxu0 0.0
    %107 = vmatprep.subr.mxu0 0.0
    %108 = vmatpush1.msra.mxu0 0.0
    %109 = vmatprep.subr.mxu0 0.0
    %110 = vmatpush1.msra.mxu0 0.0
    %111 = vmatprep.subr.mxu0 0.0
    %112 = vmatpush1.msra.mxu0 0.0
    %113 = vmatprep.mubr.f32.mxu0 0.0
    %114 = vmatmul.mubr.f32.gmra.mrb[0].mxu0 %v44
    %v115 = vpop.f32.mrb[0].mxu0
    %v116 = vadd.f32 %v40, %v115
    %v117 = vpop.f32.mrb[0].mxu0
    %118 = vmatprep.mubr.f32.mxu0 0.0
    %119 = vmatmul.mubr.f32.gmra.mrb[0].mxu0 %v47
    %v120 = vpop.f32.mrb[0].mxu0
    %v121 = vadd.f32 %v40, %v120
    %v122 = vpop.f32.mrb[0].mxu0
    %123 = vdwg.mxu0
    %v124 = vtanh.pop %v116
    %v125 = vtanh.pop %v121
    %v126 = vld [vmem:[%s3] sm:$0xff]
    %v127 = vld [vmem:[%s3 + $0x8] sm:$0xff]
    %v128 = vld [vmem:[%s4] sm:$0x1]
    %v130 = vlaneseq
    %v131 = vshrl.u32 %v130, 7
    %v132 = vsub.s32 0, %v131
    %v133 = vrot.slane %v128, %v132
    %vm135 = vcmask 130048
    %v137 = vsel %vm135, %v124, 0
    %v140 = vsel %vm135, %v125, 0
    %142 = vmatprep.subr.mxu0 0.0
    %143 = vmatpush1.msra.mxu0 %v126
    %144 = vmatprep.subr.mxu0 0.0
    %145 = vmatpush1.msra.mxu0 %v127
    %146 = vmatprep.subr.mxu0 0.0
    %147 = vmatpush1.msra.mxu0 0.0
    %148 = vmatprep.subr.mxu0 0.0
    %149 = vmatpush1.msra.mxu0 0.0
    %150 = vmatprep.subr.mxu0 0.0
    %151 = vmatpush1.msra.mxu0 0.0
    %152 = vmatprep.subr.mxu0 0.0
    %153 = vmatpush1.msra.mxu0 0.0
    %154 = vmatprep.subr.mxu0 0.0
    %155 = vmatpush1.msra.mxu0 0.0
    %156 = vmatprep.subr.mxu0 0.0
    %157 = vmatpush1.msra.mxu0 0.0
    %158 = vmatprep.subr.mxu0 0.0
    %159 = vmatpush1.msra.mxu0 0.0
    %160 = vmatprep.subr.mxu0 0.0
    %161 = vmatpush1.msra.mxu0 0.0
    %162 = vmatprep.subr.mxu0 0.0
    %163 = vmatpush1.msra.mxu0 0.0
    %164 = vmatprep.subr.mxu0 0.0
    %165 = vmatpush1.msra.mxu0 0.0
    %166 = vmatprep.subr.mxu0 0.0
    %167 = vmatpush1.msra.mxu0 0.0
    %168 = vmatprep.subr.mxu0 0.0
    %169 = vmatpush1.msra.mxu0 0.0
    %170 = vmatprep.subr.mxu0 0.0
    %171 = vmatpush1.msra.mxu0 0.0
    %172 = vmatprep.subr.mxu0 0.0
    %173 = vmatpush1.msra.mxu0 0.0
    %174 = vmatprep.subr.mxu0 0.0
    %175 = vmatpush1.msra.mxu0 0.0
    %176 = vmatprep.subr.mxu0 0.0
    %177 = vmatpush1.msra.mxu0 0.0
    %178 = vmatprep.subr.mxu0 0.0
    %179 = vmatpush1.msra.mxu0 0.0
    %180 = vmatprep.subr.mxu0 0.0
    %181 = vmatpush1.msra.mxu0 0.0
    %182 = vmatprep.subr.mxu0 0.0
    %183 = vmatpush1.msra.mxu0 0.0
    %184 = vmatprep.subr.mxu0 0.0
    %185 = vmatpush1.msra.mxu0 0.0
    %186 = vmatprep.subr.mxu0 0.0
    %187 = vmatpush1.msra.mxu0 0.0
    %188 = vmatprep.subr.mxu0 0.0
    %189 = vmatpush1.msra.mxu0 0.0
    %190 = vmatprep.subr.mxu0 0.0
    %191 = vmatpush1.msra.mxu0 0.0
    %192 = vmatprep.subr.mxu0 0.0
    %193 = vmatpush1.msra.mxu0 0.0
    %194 = vmatprep.subr.mxu0 0.0
    %195 = vmatpush1.msra.mxu0 0.0
    %196 = vmatprep.subr.mxu0 0.0
    %197 = vmatpush1.msra.mxu0 0.0
    %198 = vmatprep.subr.mxu0 0.0
    %199 = vmatpush1.msra.mxu0 0.0
    %200 = vmatprep.subr.mxu0 0.0
    %201 = vmatpush1.msra.mxu0 0.0
    %202 = vmatprep.subr.mxu0 0.0
    %203 = vmatpush1.msra.mxu0 0.0
    %204 = vmatprep.subr.mxu0 0.0
    %205 = vmatpush1.msra.mxu0 0.0
    %206 = vmatprep.mubr.f32.mxu0 0.0
    %207 = vmatmul.mubr.f32.gmra.mrb[0].mxu0 %v137
    %v208 = vpop.f32.mrb[0].mxu0
    %v209 = vadd.f32 %v133, %v208
    %v210 = vpop.f32.mrb[0].mxu0
    %211 = vmatprep.mubr.f32.mxu0 0.0
    %212 = vmatmul.mubr.f32.gmra.mrb[0].mxu0 %v140
    %v213 = vpop.f32.mrb[0].mxu0
    %v214 = vadd.f32 %v133, %v213
    %v215 = vpop.f32.mrb[0].mxu0
    %216 = vdwg.mxu0
    %vm217 = vcmask 23552
    %v218 = vsel %vm217, %v209, -inf
    %v219 = vrot.slane %v218, 4
    %v220 = vmax.f32 %v218, %v219
    %v221 = vrot.slane %v220, 2
    %v222 = vmax.f32 %v220, %v221
    %v223 = vrot.slane %v222, 1
    %v224 = vmax.f32 %v222, %v223
    %v225 = vsel %vm217, %v214, -inf
    %v226 = vrot.slane %v225, 4
    %v227 = vmax.f32 %v225, %v226
    %v228 = vrot.slane %v227, 2
    %v229 = vmax.f32 %v227, %v228
    %v230 = vrot.slane %v229, 1
    %v231 = vmax.f32 %v229, %v230
    %v232 = vsub.f32 %v209, %v224
    %v233 = vsub.f32 %v214, %v231
    %v234 = vmul.f32 %v232, 1.442695
    %v235 = vpow.pop %v234
    %v236 = vmul.f32 %v233, 1.442695
    %v237 = vpow.pop %v236
    %v238 = vsel %vm217, %v235, 0.0
    %v239 = vrot.slane %v238, 4
    %v240 = vadd.f32 %v238, %v239
    %v241 = vrot.slane %v240, 2
    %v242 = vadd.f32 %v240, %v241
    %v243 = vrot.slane %v242, 1
    %v244 = vadd.f32 %v242, %v243
    %v245 = vsel %vm217, %v237, 0.0
    %v246 = vrot.slane %v245, 4
    %v247 = vadd.f32 %v245, %v246
    %v248 = vrot.slane %v247, 2
    %v249 = vadd.f32 %v247, %v248
    %v250 = vrot.slane %v249, 1
    %v251 = vadd.f32 %v249, %v250
    %v252 = vrcp.pop %v244
    %v253 = vmul.f32 1.0, %v252
    %v254 = vrcp.pop %v251
    %v255 = vmul.f32 1.0, %v254
    %v256 = vmul.f32 %v235, %v253
    %v257 = vmul.f32 %v237, %v255
    %258 = vst.msk [vmem:[%s8] sm:$0xff] %vm217, %v256
    %259 = vst.msk [vmem:[%s8 + $0x8] sm:$0xff] %vm217, %v257
    %261 = vset.pattern.permute.xlu0 0
    %262 = vperm.xlu0 %261, %v256
    %v263 = vpop.permute.xlu0 %262
    %266 = vset.pattern.permute.xlu0 0
    %267 = vperm.xlu0 %266, %v257
    %v268 = vpop.permute.xlu0 %267
    %v270 = vmul.f32 %v29, %v263
    %v271 = vmul.f32 %v30, %v268
    %v272 = vsel %vm42, %v270, 0.0
    %v273 = vrot.slane %v272, 4
    %v274 = vadd.f32 %v272, %v273
    %v275 = vrot.slane %v274, 2
    %v276 = vadd.f32 %v274, %v275
    %v277 = vrot.slane %v276, 1
    %v278 = vadd.f32 %v276, %v277
    %v279 = vsel %vm42, %v271, 0.0
    %v280 = vrot.slane %v279, 4
    %v281 = vadd.f32 %v279, %v280
    %v282 = vrot.slane %v281, 2
    %v283 = vadd.f32 %v281, %v282
    %v284 = vrot.slane %v283, 1
    %v285 = vadd.f32 %v283, %v284
    %286 = vset.pattern.permute.xlu0 1
    %287 = vperm.xlu0 %286, %v256
    %v288 = vpop.permute.xlu0 %287
    %290 = vset.pattern.permute.xlu0 1
    %291 = vperm.xlu0 %290, %v257
    %v292 = vpop.permute.xlu0 %291
    %v294 = vmul.f32 %v29, %v288
    %v295 = vmul.f32 %v30, %v292
    %v296 = vsel %vm42, %v294, 0.0
    %v297 = vrot.slane %v296, 4
    %v298 = vadd.f32 %v296, %v297
    %v299 = vrot.slane %v298, 2
    %v300 = vadd.f32 %v298, %v299
    %v301 = vrot.slane %v300, 1
    %v302 = vadd.f32 %v300, %v301
    %v303 = vsel %vm42, %v295, 0.0
    %v304 = vrot.slane %v303, 4
    %v305 = vadd.f32 %v303, %v304
    %v306 = vrot.slane %v305, 2
    %v307 = vadd.f32 %v305, %v306
    %v308 = vrot.slane %v307, 1
    %v309 = vadd.f32 %v307, %v308
    %310 = vset.pattern.permute.xlu0 2
    %311 = vperm.xlu0 %310, %v256
    %v312 = vpop.permute.xlu0 %311
    %314 = vset.pattern.permute.xlu0 2
    %315 = vperm.xlu0 %314, %v257
    %v316 = vpop.permute.xlu0 %315
    %v318 = vmul.f32 %v29, %v312
    %v319 = vmul.f32 %v30, %v316
    %v320 = vsel %vm42, %v318, 0.0
    %v321 = vrot.slane %v320, 4
    %v322 = vadd.f32 %v320, %v321
    %v323 = vrot.slane %v322, 2
    %v324 = vadd.f32 %v322, %v323
    %v325 = vrot.slane %v324, 1
    %v326 = vadd.f32 %v324, %v325
    %v327 = vsel %vm42, %v319, 0.0
    %v328 = vrot.slane %v327, 4
    %v329 = vadd.f32 %v327, %v328
    %v330 = vrot.slane %v329, 2
    %v331 = vadd.f32 %v329, %v330
    %v332 = vrot.slane %v331, 1
    %v333 = vadd.f32 %v331, %v332
    %vm336 = vcmask 1041409
    %v337 = vsel %vm336, %v285, %v278
    %v341 = vsel %vm336, %v309, %v302
    %342 = vrot.lane.b32.xlu0 %v341, 32
    %v343 = vpop.permute.xlu0 %342
    %v347 = vsel %vm336, %v333, %v326
    %348 = vrot.lane.b32.xlu0 %v347, 64
    %v349 = vpop.permute.xlu0 %348
    %v351 = vsel %vm42, %v337, %v343
    %vm352 = vcmask 523264
    %v353 = vsel %vm352, %v351, %v349
    %v354 = vld [vmem:[%s5] sm:$0xff]
    %v355 = vld [vmem:[%s5 + $0x8] sm:$0xff]
    %v356 = vld [vmem:[%s5 + $0x10] sm:$0xff]
    %v357 = vld [vmem:[%s5 + $0x18] sm:$0xff]
    %v358 = vld [vmem:[%s5 + $0x20] sm:$0xff]
    %v359 = vld [vmem:[%s5 + $0x28] sm:$0xff]
    %v360 = vld [vmem:[%s5 + $0x30] sm:$0xff]
    %v361 = vld [vmem:[%s5 + $0x38] sm:$0xff]
    %v362 = vld [vmem:[%s5 + $0x40] sm:$0xff]
    %v363 = vld [vmem:[%s5 + $0x48] sm:$0xff]
    %v364 = vld [vmem:[%s5 + $0x50] sm:$0xff]
    %v365 = vld [vmem:[%s5 + $0x58] sm:$0xff]
    %v366 = vld [vmem:[%s6] sm:$0x1]
    %v368 = vlaneseq
    %v369 = vshrl.u32 %v368, 7
    %v370 = vsub.s32 0, %v369
    %v371 = vrot.slane %v366, %v370
    %vm373 = vcmask 785408
    %v375 = vsel %vm373, %v353, 0
    %377 = vmatprep.subr.mxu0 0.0
    %378 = vmatpush1.msra.mxu0 %v354
    %379 = vmatprep.subr.mxu0 0.0
    %380 = vmatpush1.msra.mxu0 %v355
    %381 = vmatprep.subr.mxu0 0.0
    %382 = vmatpush1.msra.mxu0 %v356
    %383 = vmatprep.subr.mxu0 0.0
    %384 = vmatpush1.msra.mxu0 %v357
    %385 = vmatprep.subr.mxu0 0.0
    %386 = vmatpush1.msra.mxu0 %v358
    %387 = vmatprep.subr.mxu0 0.0
    %388 = vmatpush1.msra.mxu0 %v359
    %389 = vmatprep.subr.mxu0 0.0
    %390 = vmatpush1.msra.mxu0 %v360
    %391 = vmatprep.subr.mxu0 0.0
    %392 = vmatpush1.msra.mxu0 %v361
    %393 = vmatprep.subr.mxu0 0.0
    %394 = vmatpush1.msra.mxu0 %v362
    %395 = vmatprep.subr.mxu0 0.0
    %396 = vmatpush1.msra.mxu0 %v363
    %397 = vmatprep.subr.mxu0 0.0
    %398 = vmatpush1.msra.mxu0 %v364
    %399 = vmatprep.subr.mxu0 0.0
    %400 = vmatpush1.msra.mxu0 %v365
    %401 = vmatprep.subr.mxu0 0.0
    %402 = vmatpush1.msra.mxu0 0.0
    %403 = vmatprep.subr.mxu0 0.0
    %404 = vmatpush1.msra.mxu0 0.0
    %405 = vmatprep.subr.mxu0 0.0
    %406 = vmatpush1.msra.mxu0 0.0
    %407 = vmatprep.subr.mxu0 0.0
    %408 = vmatpush1.msra.mxu0 0.0
    %409 = vmatprep.subr.mxu0 0.0
    %410 = vmatpush1.msra.mxu0 0.0
    %411 = vmatprep.subr.mxu0 0.0
    %412 = vmatpush1.msra.mxu0 0.0
    %413 = vmatprep.subr.mxu0 0.0
    %414 = vmatpush1.msra.mxu0 0.0
    %415 = vmatprep.subr.mxu0 0.0
    %416 = vmatpush1.msra.mxu0 0.0
    %417 = vmatprep.subr.mxu0 0.0
    %418 = vmatpush1.msra.mxu0 0.0
    %419 = vmatprep.subr.mxu0 0.0
    %420 = vmatpush1.msra.mxu0 0.0
    %421 = vmatprep.subr.mxu0 0.0
    %422 = vmatpush1.msra.mxu0 0.0
    %423 = vmatprep.subr.mxu0 0.0
    %424 = vmatpush1.msra.mxu0 0.0
    %425 = vmatprep.subr.mxu0 0.0
    %426 = vmatpush1.msra.mxu0 0.0
    %427 = vmatprep.subr.mxu0 0.0
    %428 = vmatpush1.msra.mxu0 0.0
    %429 = vmatprep.subr.mxu0 0.0
    %430 = vmatpush1.msra.mxu0 0.0
    %431 = vmatprep.subr.mxu0 0.0
    %432 = vmatpush1.msra.mxu0 0.0
    %433 = vmatprep.subr.mxu0 0.0
    %434 = vmatpush1.msra.mxu0 0.0
    %435 = vmatprep.subr.mxu0 0.0
    %436 = vmatpush1.msra.mxu0 0.0
    %437 = vmatprep.subr.mxu0 0.0
    %438 = vmatpush1.msra.mxu0 0.0
    %439 = vmatprep.subr.mxu0 0.0
    %440 = vmatpush1.msra.mxu0 0.0
    %441 = vmatprep.mubr.f32.mxu0 0.0
    %442 = vmatmul.mubr.f32.gmra.mrb[0].mxu0 %v375
    %v443 = vpop.f32.mrb[0].mxu0
    %v444 = vadd.f32 %v371, %v443
    %v445 = vpop.f32.mrb[0].mxu0
    %446 = vdwg.mxu0
    %vm447 = vcmask 25600
    %v448 = vsel %vm447, %v444, -inf
    %449 = vmax.xlane.f32.xlu0 %v448
    %v450 = vpop.xlane.xlu0 %449
    %v451 = vsub.f32 %v444, %v450
    %v452 = vmul.f32 %v451, 1.442695
    %v453 = vpow.pop %v452
    %v454 = vsel %vm447, %v453, 0.0
    %455 = vadd.xlane.f32.xlu0 %v454
    %v456 = vpop.xlane.xlu0 %455
    %v457 = vlog2.pop %v456
    %v458 = vmul.f32 %v457, 0.6931472
    %v459 = vsub.f32 %v451, %v458
    %460 = vst.msk [vmem:[#allocation2] sm:$0x3] %vm447, %v459
    // Predicated region
    $region30: #{tpu_custom_call.1} parent=1 // pred_check
      _
    $region31: #{tpu_custom_call.1} parent=1 // pred_check_branch
      %462 = sbr.rel (0) target = $region33
    $region32: #{tpu_custom_call.1} parent=1 // pred_region
      %s464 = ssub.s32 32, 32
      %465 = vsyncadd [#allocation3], %s464
      %s467 = sshll.u32 [#allocation2], 4
      %s468 = int_to_ptr.vmem [resolvable:$true] %s467
      %470 = dma.vmem_to_hbm [thread:$0]  %s468, 32, %s7, [#allocation3]
    $region33: #{tpu_custom_call.1} parent=1 // pred_fallthru
      _
    // Predicated region
    $region34: #{tpu_custom_call.1} parent=1 // pred_check
      _
    $region35: #{tpu_custom_call.1} parent=1 // pred_check_branch
      %472 = sbr.rel (0) target = $region37
    $region36: #{tpu_custom_call.1} parent=1 // pred_region
      _
    $region37: #{tpu_custom_call.1} parent=1 // pred_fallthru
      _
    // Predicated region
    $region38: #{tpu_custom_call.1} parent=1 // pred_check
      _
    $region39: #{tpu_custom_call.1} parent=1 // pred_check_branch
      %474 = sbr.rel (0) target = $region41
    $region40: #{tpu_custom_call.1} parent=1 // pred_region
      %475 = dma.done [#allocation3], 32
    $region41: #{tpu_custom_call.1} parent=1 // pred_fallthru
      _
    // Predicated region
    $region42: #{tpu_custom_call.1} parent=1 // pred_check
      _
    $region43: #{tpu_custom_call.1} parent=1 // pred_check_branch
      %477 = sbr.rel (0) target = $region45
    $region44: #{tpu_custom_call.1} parent=1 // pred_region
      _
    $region45: #{tpu_custom_call.1} parent=1 // pred_fallthru
      _
    %478 = vsyncpa [#allocation3], 1

</llo_original>
